<compile_context>
chip_gen: v5e
topology: v5e:2x2
jax: 0.10.0
libtpu: 0.0.40
codegen_flags: <defaults>
</compile_context>

<pallas_src>
import math

import jax
import jax.numpy as jnp
from jax import lax
from jax.experimental import pallas as pl
from jax.experimental.pallas import tpu as pltpu


# ----------------------------------------------------------------------------
# Row padding / tiling helpers
# ----------------------------------------------------------------------------
def _round_up(n, m):
    return ((n + m - 1) // m) * m


def _pad_and_tile(bn, max_tile=1024):
    """Pick (padded row count, row tile).

    Returns (bn_pad, tm) with tm a multiple of 128 that divides bn_pad and
    grid = bn_pad // tm >= 2 whenever there is enough work (keeps both v7x
    TensorCores busy); tiny inputs use a single grid step.
    """
    if bn <= 128:
        return 128, 128                      # grid = 1: too little work to split
    if bn <= 2 * max_tile:
        bn_pad = _round_up(bn, 256)
        return bn_pad, bn_pad // 2           # grid = 2
    bn_pad = _round_up(bn, max_tile)
    return bn_pad, max_tile                  # grid >= 3


def _pad_rows(x2d, bn_pad):
    bn = x2d.shape[0]
    if bn_pad == bn:
        return x2d
    return jnp.pad(x2d, ((0, bn_pad - bn), (0, 0)))


# ----------------------------------------------------------------------------
# Pallas kernels
# ----------------------------------------------------------------------------
def _mlp3_kernel(x_ref, w1_ref, b1_ref, w2_ref, b2_ref, w3_ref, b3_ref, o_ref):
    """3-layer MLP head: relu(x@w1+b1) -> relu(.@w2+b2) -> .@w3+b3 (out_dim=1).

    The final (H -> 1) projection is done as a VPU multiply + lane reduce
    (avoids an N=1 MXU matmul) and the per-row logits are stored lane-dense:
    128 rows per 128-lane vector, output block (1, TM//128, 128).
    """
    x = x_ref[...].astype(jnp.float32)
    h = jnp.dot(x, w1_ref[...], preferred_element_type=jnp.float32) + b1_ref[...]
    h = jnp.maximum(h, 0.0)
    h = jnp.dot(h, w2_ref[...], preferred_element_type=jnp.float32) + b2_ref[...]
    h = jnp.maximum(h, 0.0)

    tm, hdim = h.shape
    h3 = h.reshape(tm // 128, 128, hdim)          # split row dim; minor dim unchanged
    logits = jnp.sum(h3 * w3_ref[...], axis=-1)   # (TM//128, 128) lane-dense
    logits = logits + b3_ref[0]                   # scalar bias from SMEM
    o_ref[...] = logits[None, :, :].astype(o_ref.dtype)


def _layernorm_kernel(x_ref, g_ref, b_ref, o_ref):
    """LayerNorm over the last dim (PyTorch semantics: biased var, eps=1e-5)."""
    x = x_ref[...].astype(jnp.float32)
    mean = jnp.mean(x, axis=-1, keepdims=True)
    var = jnp.mean((x - mean) ** 2, axis=-1, keepdims=True)
    inv = lax.rsqrt(var + 1e-5)
    y = (x - mean) * inv * g_ref[...] + b_ref[...]
    o_ref[...] = y.astype(o_ref.dtype)


# ----------------------------------------------------------------------------
# Wrappers
# ----------------------------------------------------------------------------
def mlp3_pallas(x, w1, b1, w2, b2, w3, b3):
    """x: (B, N, C) -> (B, N) float32 upsampling-mask logits."""
    B, N, C = x.shape
    H = w1.shape[1]
    BN = B * N
    BN_pad, TM = _pad_and_tile(BN)
    G = BN_pad // TM

    xf = _pad_rows(x.reshape(BN, C), BN_pad)

    out = pl.pallas_call(
        _mlp3_kernel,
        out_shape=jax.ShapeDtypeStruct((G, TM // 128, 128), jnp.float32),
        grid=(G,),
        in_specs=[
            pl.BlockSpec((TM, C), lambda i: (i, 0)),
            pl.BlockSpec((C, H), lambda i: (0, 0)),
            pl.BlockSpec((1, H), lambda i: (0, 0)),
            pl.BlockSpec((H, H), lambda i: (0, 0)),
            pl.BlockSpec((1, H), lambda i: (0, 0)),
            pl.BlockSpec((1, H), lambda i: (0, 0)),                  # w3 as a row
            pl.BlockSpec(memory_space=pltpu.MemorySpace.SMEM),       # b3 scalar
        ],
        out_specs=pl.BlockSpec((1, TM // 128, 128), lambda i: (i, 0, 0)),
        compiler_params=pltpu.CompilerParams(dimension_semantics=("parallel",)),
    )(xf, w1, b1.reshape(1, H), w2, b2.reshape(1, H),
      w3.reshape(1, H), b3.reshape(1))
    return out.reshape(BN_pad)[:BN].reshape(B, N)


def layernorm_pallas(x, gamma, beta):
    """x: (B, N, D) -> (B, N, D), LayerNorm over D.  Preserves input dtype
    (bf16 inputs halve HBM traffic; math is f32 inside the kernel)."""
    B, N, D = x.shape
    BN = B * N
    BN_pad, TM = _pad_and_tile(BN)

    xf = _pad_rows(x.reshape(BN, D), BN_pad)

    out = pl.pallas_call(
        _layernorm_kernel,
        out_shape=jax.ShapeDtypeStruct((BN_pad, D), x.dtype),
        grid=(BN_pad // TM,),
        in_specs=[
            pl.BlockSpec((TM, D), lambda i: (i, 0)),
            pl.BlockSpec((1, D), lambda i: (0, 0)),
            pl.BlockSpec((1, D), lambda i: (0, 0)),
        ],
        out_specs=pl.BlockSpec((TM, D), lambda i: (i, 0)),
        compiler_params=pltpu.CompilerParams(dimension_semantics=("parallel",)),
    )(xf, gamma.reshape(1, D), beta.reshape(1, D))
    return out[:BN].reshape(B, N, D)


# ----------------------------------------------------------------------------
# MROTB configuration + deterministic parameter init
# ----------------------------------------------------------------------------
N_SCALES = 3
BACKBONE_DIMS = [32, 32, 32]
OUT_DIM = 32
ORACLE_TEACHER_RATIO = 0.5
ALL_OUT_FEATURES = ["res4", "res3", "res2"]
ALL_OUT_FEATURES_SCALES = {k: len(ALL_OUT_FEATURES) - i - 1
                           for i, k in enumerate(ALL_OUT_FEATURES)}
FEATURE_STRIDE = {"res2": 4, "res3": 8, "res4": 16}
# backbone at scale s emits the first (s+1) features (res4 emitted by all scales,
# finer features appear at later scales), matching out_norms[i] dim = sum(dims[i:])
BACKBONE_OUT_FEATURES = [ALL_OUT_FEATURES[: s + 1] for s in range(N_SCALES)]


def _trunc_normal(key, shape, std=0.02):
    return std * jax.random.truncated_normal(key, -2.0, 2.0, shape, jnp.float32)


def init_mrotb_params(key):
    params = {"upsamplers": [], "out_norms": [], "backbone_proj": []}
    for s in range(N_SCALES - 1):
        C = BACKBONE_DIMS[s]
        k1, k2, k3, key = jax.random.split(key, 4)
        params["upsamplers"].append({
            "w1": _trunc_normal(k1, (C, C)), "b1": jnp.zeros((C,), jnp.float32),
            "w2": _trunc_normal(k2, (C, C)), "b2": jnp.zeros((C,), jnp.float32),
            "w3": _trunc_normal(k3, (C, 1)), "b3": jnp.zeros((1,), jnp.float32),
        })
    for i in range(N_SCALES):
        D = sum(BACKBONE_DIMS[i:])
        params["out_norms"].append({
            "gamma": jnp.ones((D,), jnp.float32),
            "beta": jnp.zeros((D,), jnp.float32),
        })
    for s in range(N_SCALES):
        key, k = jax.random.split(key)
        params["backbone_proj"].append(_trunc_normal(k, (3, BACKBONE_DIMS[s])))
    return params


# ----------------------------------------------------------------------------
# Synthetic backbone (the real backbones are external nn.Modules passed into
# MROTB; MROTB itself only consumes their (B, N, C) token outputs).
# TODO(synk): replace with the real mixres backbone forward.
# ----------------------------------------------------------------------------
def synthetic_backbone(im, scale, proj):
    """im: (B, 3, H, W) NCHW -> dict of token features for this scale."""
    B, Cin, H, W = im.shape
    out = {}
    min_ss = None
    for f in BACKBONE_OUT_FEATURES[scale]:
        stride = FEATURE_STRIDE[f]
        h, w = H // stride, W // stride
        pooled = im.reshape(B, Cin, h, stride, w, stride).mean(axis=(3, 5))  # (B,3,h,w)
        tokens = pooled.transpose(0, 2, 3, 1).reshape(B, h * w, Cin)         # (B,N,3)
        feat = tokens @ proj                                                 # (B,N,C)
        yy, xx = jnp.meshgrid(jnp.arange(h), jnp.arange(w), indexing="ij")
        pos = jnp.stack([yy.reshape(-1), xx.reshape(-1)], axis=-1).astype(jnp.float32)
        pos = jnp.broadcast_to(pos[None], (B, h * w, 2))
        fscale = jnp.full((B, h * w), float(ALL_OUT_FEATURES_SCALES[f]), jnp.float32)
        out[f] = feat
        out[f + "_pos"] = pos
        out[f + "_scale"] = fscale
        out[f + "_spatial_shape"] = (h, w)
        min_ss = (h, w) if min_ss is None else (min(min_ss[0], h), min(min_ss[1], w))
    out["min_spatial_shape"] = min_ss
    return out


# ----------------------------------------------------------------------------
# MROTB forward (inference path)
# ----------------------------------------------------------------------------
# TODO(synk): at real sizes the 2 MLP and 3 LayerNorm pallas_calls could be
# consolidated into fewer fatter calls (scalar-prefetched row/width table) to
# amortize launch/pipeline overhead.
def mrotb_forward(params, im, sem_seg_gt=None, target_pad=None):
    outs = {}
    features = None
    features_pos = None
    upsampling_mask = None
    output = None

    for scale in range(N_SCALES):
        output = synthetic_backbone(im, scale, params["backbone_proj"][scale])

        all_feat, all_scale, all_pos, all_ss = [], [], [], []
        for f in BACKBONE_OUT_FEATURES[scale]:
            feat = output[f]
            feat_pos = output[f + "_pos"]
            feat_scale = output[f + "_scale"]
            feat_ss = output[f + "_spatial_shape"]

            if (f + "_pos") in outs:
                # TODO(synk): find_pos_org_order gather — positions are identical
                # across synthetic backbones, so the reorder is the identity here.
                outs[f] = jnp.concatenate([outs[f], feat], axis=2)
            else:
                outs[f] = feat
                outs[f + "_pos"] = feat_pos
                outs[f + "_scale"] = feat_scale
                outs[f + "_spatial_shape"] = feat_ss

            all_feat.append(feat)
            all_pos.append(feat_pos)
            all_scale.append(feat_scale)
            all_ss.append(feat_ss)

        # TODO(synk): generate_*_oracle_upsampling_mask_edge is undefined in the
        # provided source; oracle-teacher branch (training only) is skipped.
        if scale < N_SCALES - 1:
            up = params["upsamplers"][scale]
            upsampling_mask_pred = mlp3_pallas(
                all_feat[0], up["w1"], up["b1"], up["w2"], up["b2"], up["w3"], up["b3"])
            outs[f"upsampling_mask_pred_{scale}"] = upsampling_mask_pred
            outs[f"upsampling_mask_pos_{scale}"] = jnp.concatenate(
                [all_scale[0][:, :, None], all_pos[0]], axis=2)
            upsampling_mask = upsampling_mask_pred

        all_pos_cat = jnp.concatenate(all_pos, axis=1)
        all_scale_cat = jnp.concatenate(all_scale, axis=1)
        features_pos = jnp.concatenate([all_scale_cat[:, :, None], all_pos_cat], axis=2)
        features = jnp.concatenate(all_feat, axis=1)

    outs["min_spatial_shape"] = output["min_spatial_shape"]

    for i in range(N_SCALES):
        out_idx = N_SCALES - i + 1
        ln = params["out_norms"][i]
        outs[f"res{out_idx}"] = layernorm_pallas(outs[f"res{out_idx}"], ln["gamma"], ln["beta"])
    return outs


# ----------------------------------------------------------------------------
if __name__ == "__main__":
    key = jax.random.PRNGKey(0)
    pkey, ikey = jax.random.split(key)
    params = init_mrotb_params(pkey)

    B, H, W = 2, 32, 32
    im = jax.random.normal(ikey, (B, 3, H, W), jnp.float32)          # NCHW like PyTorch
    sem_seg_gt = jnp.zeros((B, H, W), jnp.int32)                      # unused (oracle path skipped)
    target_pad = jnp.zeros((B, 2), jnp.int32)

    outs = mrotb_forward(params, im, sem_seg_gt, target_pad)
    jax.block_until_ready([v for v in outs.values() if isinstance(v, jnp.ndarray)])

    # shape sanity checks
    assert outs["res4"].shape == (B, (H // 16) * (W // 16), sum(BACKBONE_DIMS))
    assert outs["res3"].shape == (B, (H // 8) * (W // 8), sum(BACKBONE_DIMS[1:]))
    assert outs["res2"].shape == (B, (H // 4) * (W // 4), BACKBONE_DIMS[2])
    assert outs["upsampling_mask_pred_0"].shape == (B, (H // 16) * (W // 16))

    # numerical sanity checks against pure-JAX references
    feat0 = synthetic_backbone(im, 0, params["backbone_proj"][0])["res4"]
    up = params["upsamplers"][0]
    h1 = jnp.maximum(feat0 @ up["w1"] + up["b1"], 0.0)
    h2 = jnp.maximum(h1 @ up["w2"] + up["b2"], 0.0)
    mlp_ref = (h2 @ up["w3"] + up["b3"])[..., 0]
    assert jnp.allclose(outs["upsampling_mask_pred_0"], mlp_ref, rtol=2e-3, atol=2e-3)

    def ln_ref(x, g, b):
        m = x.mean(-1, keepdims=True)
        v = ((x - m) ** 2).mean(-1, keepdims=True)
        return (x - m) * lax.rsqrt(v + 1e-5) * g + b

    res2_pre = synthetic_backbone(im, 2, params["backbone_proj"][2])["res2"]
    ln = params["out_norms"][2]
    assert jnp.allclose(outs["res2"], ln_ref(res2_pre, ln["gamma"], ln["beta"]),
                        rtol=2e-3, atol=2e-3)

    print("KERNEL_OK")
</pallas_src>

<mosaic_0001>
module attributes {stable_mosaic.version = 11 : i64} {
  func.func @_mlp3_kernel(%arg0: i32, %arg1: memref<128x32xf32, #tpu.memory_space<vmem>>, %arg2: memref<32x32xf32, #tpu.memory_space<vmem>>, %arg3: memref<1x32xf32, #tpu.memory_space<vmem>>, %arg4: memref<32x32xf32, #tpu.memory_space<vmem>>, %arg5: memref<1x32xf32, #tpu.memory_space<vmem>>, %arg6: memref<1x32xf32, #tpu.memory_space<vmem>>, %arg7: memref<1xf32, #tpu.memory_space<smem>>, %arg8: memref<1x1x128xf32, #tpu.memory_space<vmem>>) attributes {dimension_semantics = [#tpu.dimension_semantics<parallel>], iteration_bounds = array<i64: 1>, scalar_prefetch = 0 : i64, scratch_operands = 0 : i64, tpu.core_type = #tpu.core_type<tc>, window_params = [{transform_indices = @transform_0, window_bounds = array<i64: 128, 32>}, {pipeline_mode = #tpu.pipeline_mode<synchronous>, transform_indices = @transform_1, window_bounds = array<i64: 32, 32>}, {pipeline_mode = #tpu.pipeline_mode<synchronous>, transform_indices = @transform_2, window_bounds = array<i64: 1, 32>}, {pipeline_mode = #tpu.pipeline_mode<synchronous>, transform_indices = @transform_3, window_bounds = array<i64: 32, 32>}, {pipeline_mode = #tpu.pipeline_mode<synchronous>, transform_indices = @transform_4, window_bounds = array<i64: 1, 32>}, {pipeline_mode = #tpu.pipeline_mode<synchronous>, transform_indices = @transform_5, window_bounds = array<i64: 1, 32>}, {transform_indices = @transform_6, window_bounds = array<i64: 1>}, {transform_indices = @transform_7, window_bounds = array<i64: 1, 1, 128>}]} {
    %c0 = arith.constant 0 : index
    %c0_0 = arith.constant 0 : index
    %0 = vector.load %arg1[%c0, %c0_0] : memref<128x32xf32, #tpu.memory_space<vmem>>, vector<128x32xf32>
    %c0_1 = arith.constant 0 : index
    %c0_2 = arith.constant 0 : index
    %1 = vector.load %arg2[%c0_1, %c0_2] : memref<32x32xf32, #tpu.memory_space<vmem>>, vector<32x32xf32>
    %cst = arith.constant dense<0.000000e+00> : vector<128x32xf32>
    %2 = tpu.matmul %0, %1, %cst {dimension_numbers = #tpu.dot_dimension_numbers<[1], [0], [0], [1], [0, 0, 1, 1], [], []>} : vector<128x32xf32>, vector<32x32xf32>, vector<128x32xf32> -> vector<128x32xf32>
    %c0_3 = arith.constant 0 : index
    %c0_4 = arith.constant 0 : index
    %3 = vector.load %arg3[%c0_3, %c0_4] : memref<1x32xf32, #tpu.memory_space<vmem>>, vector<1x32xf32>
    %4 = vector.broadcast %3 : vector<1x32xf32> to vector<128x32xf32>
    %5 = arith.addf %2, %4 : vector<128x32xf32>
    %cst_5 = arith.constant 0.000000e+00 : f32
    %6 = vector.broadcast %cst_5 : f32 to vector<128x32xf32>
    %7 = arith.maximumf %5, %6 : vector<128x32xf32>
    %c0_6 = arith.constant 0 : index
    %c0_7 = arith.constant 0 : index
    %8 = vector.load %arg4[%c0_6, %c0_7] : memref<32x32xf32, #tpu.memory_space<vmem>>, vector<32x32xf32>
    %cst_8 = arith.constant dense<0.000000e+00> : vector<128x32xf32>
    %9 = tpu.matmul %7, %8, %cst_8 {dimension_numbers = #tpu.dot_dimension_numbers<[1], [0], [0], [1], [0, 0, 1, 1], [], []>} : vector<128x32xf32>, vector<32x32xf32>, vector<128x32xf32> -> vector<128x32xf32>
    %c0_9 = arith.constant 0 : index
    %c0_10 = arith.constant 0 : index
    %10 = vector.load %arg5[%c0_9, %c0_10] : memref<1x32xf32, #tpu.memory_space<vmem>>, vector<1x32xf32>
    %11 = vector.broadcast %10 : vector<1x32xf32> to vector<128x32xf32>
    %12 = arith.addf %9, %11 : vector<128x32xf32>
    %cst_11 = arith.constant 0.000000e+00 : f32
    %13 = vector.broadcast %cst_11 : f32 to vector<128x32xf32>
    %14 = arith.maximumf %12, %13 : vector<128x32xf32>
    %15 = vector.shape_cast %14 : vector<128x32xf32> to vector<1x128x32xf32>
    %c0_12 = arith.constant 0 : index
    %c0_13 = arith.constant 0 : index
    %16 = vector.load %arg6[%c0_12, %c0_13] : memref<1x32xf32, #tpu.memory_space<vmem>>, vector<1x32xf32>
    %17 = vector.shape_cast %16 : vector<1x32xf32> to vector<1x1x32xf32>
    %18 = vector.broadcast %17 : vector<1x1x32xf32> to vector<1x128x32xf32>
    %19 = arith.mulf %15, %18 : vector<1x128x32xf32>
    %cst_14 = arith.constant dense<0.000000e+00> : vector<1x128xf32>
    %20 = vector.multi_reduction <add>, %19, %cst_14 [2] : vector<1x128x32xf32> to vector<1x128xf32>
    %c0_15 = arith.constant 0 : index
    %21 = memref.load %arg7[%c0_15] : memref<1xf32, #tpu.memory_space<smem>>
    %22 = vector.broadcast %21 : f32 to vector<1x128xf32>
    %23 = arith.addf %20, %22 : vector<1x128xf32>
    %24 = vector.shape_cast %23 : vector<1x128xf32> to vector<1x1x128xf32>
    %c0_16 = arith.constant 0 : index
    %c0_17 = arith.constant 0 : index
    %c0_18 = arith.constant 0 : index
    %25 = vector.load %arg8[%c0_16, %c0_17, %c0_18] : memref<1x1x128xf32, #tpu.memory_space<vmem>>, vector<1x1x128xf32>
    tpu.vector_store %arg8[%c0_16, %c0_17, %c0_18], %24 {strides = array<i32>} : memref<1x1x128xf32, #tpu.memory_space<vmem>>, vector<1x1x128xf32>,
    return
  }
  func.func @transform_0(%arg0: i32) -> (i32, i32) {
    %c0_i32 = arith.constant 0 : i32
    %c0_i32_0 = arith.constant 0 : i32
    return %arg0, %c0_i32 : i32, i32
  }
  func.func @transform_1(%arg0: i32) -> (i32, i32) {
    %c0_i32 = arith.constant 0 : i32
    %c0_i32_0 = arith.constant 0 : i32
    %c0_i32_1 = arith.constant 0 : i32
    return %c0_i32, %c0_i32_0 : i32, i32
  }
  func.func @transform_2(%arg0: i32) -> (i32, i32) {
    %c0_i32 = arith.constant 0 : i32
    %c0_i32_0 = arith.constant 0 : i32
    %c0_i32_1 = arith.constant 0 : i32
    return %c0_i32, %c0_i32_0 : i32, i32
  }
  func.func @transform_3(%arg0: i32) -> (i32, i32) {
    %c0_i32 = arith.constant 0 : i32
    %c0_i32_0 = arith.constant 0 : i32
    %c0_i32_1 = arith.constant 0 : i32
    return %c0_i32, %c0_i32_0 : i32, i32
  }
  func.func @transform_4(%arg0: i32) -> (i32, i32) {
    %c0_i32 = arith.constant 0 : i32
    %c0_i32_0 = arith.constant 0 : i32
    %c0_i32_1 = arith.constant 0 : i32
    return %c0_i32, %c0_i32_0 : i32, i32
  }
  func.func @transform_5(%arg0: i32) -> (i32, i32) {
    %c0_i32 = arith.constant 0 : i32
    %c0_i32_0 = arith.constant 0 : i32
    %c0_i32_1 = arith.constant 0 : i32
    return %c0_i32, %c0_i32_0 : i32, i32
  }
  func.func @transform_6(%arg0: i32) -> i32 {
    %c0_i32 = arith.constant 0 : i32
    %c0_i32_0 = arith.constant 0 : i32
    return %c0_i32 : i32
  }
  func.func @transform_7(%arg0: i32) -> (i32, i32, i32) {
    %c0_i32 = arith.constant 0 : i32
    %c0_i32_0 = arith.constant 0 : i32
    %c0_i32_1 = arith.constant 0 : i32
    return %arg0, %c0_i32, %c0_i32_0 : i32, i32, i32
  }
}

</mosaic_0001>

<llo_original>
// kernel: tpu_custom_call.1
$region0: #{tpu_custom_call.1}
  #allocation0 [shape = 'u32[]', space=smem, size = 0x4, offset = 0x4, fixed_abs, tag = 'smem constant byte address 0x4 - core index']
  #allocation1 [shape = 'u32[72,128]{1,0:T(1,128)}', space=vmem, size = 0x9000, scoped, tag = 'internal scratch']
  #allocation2 [shape = 'f32[1]{0:T(128)S(6)}', space=smem, size = 0x200, scoped, tag = 'scoped memory for tpu_custom_call.1']
  %s0 = inlined_call_operand.vmem [shape: f32[128,32], index: 0, kind: input, shape index: {}]
  %s1 = inlined_call_operand.vmem [shape: f32[32,32], index: 1, kind: input, shape index: {}]
  %s2 = inlined_call_operand.vmem [shape: f32[1,32], index: 2, kind: input, shape index: {}]
  %s3 = inlined_call_operand.vmem [shape: f32[32,32], index: 3, kind: input, shape index: {}]
  %s4 = inlined_call_operand.vmem [shape: f32[1,32], index: 4, kind: input, shape index: {}]
  %s5 = inlined_call_operand.vmem [shape: f32[1,32], index: 5, kind: input, shape index: {}]
  %s6 = inlined_call_operand.<no memory space> [shape: f32[1], index: 6, kind: input, shape index: {}]
  %s7 = inlined_call_operand.hbm [shape: f32[1,1,128], index: 7, kind: output, shape index: {}]
  %s8 = sld [smem:[#allocation0]]
  $region38: #{tpu_custom_call.1} parent=0
    _
  %s10 = ssub.s32 1, %s8
  %s11 = scalar_select 0, %s10, %s8
  %12 = sst [smem:[#allocation2]] %s6
  $region1: #{tpu_custom_call.1} parent=0
    #allocation3 [shape = 'u8[512]{0}', space=vmem, size = 0x400, scoped, tag = 'output window, operand 0, single buffered']
    #allocation4 [shape = 's32[1]{0}', space=sflag, size = 0x4, scoped, tag = 'scoped memory for tpu_custom_call.1']
    %13 = vsyncpa [#allocation4], 0
    // Predicated region
    $region2: #{tpu_custom_call.1} parent=1 // pred_check
      _
    $region3: #{tpu_custom_call.1} parent=1 // pred_check_branch
      %15 = sbr.rel (0) target = $region5
    $region4: #{tpu_custom_call.1} parent=1 // pred_region
      _
    $region5: #{tpu_custom_call.1} parent=1 // pred_fallthru
      _
    // Predicated region
    $region6: #{tpu_custom_call.1} parent=1 // pred_check
      _
    $region7: #{tpu_custom_call.1} parent=1 // pred_check_branch
      %17 = sbr.rel (0) target = $region9
    $region8: #{tpu_custom_call.1} parent=1 // pred_region
      _
    $region9: #{tpu_custom_call.1} parent=1 // pred_fallthru
      _
    // Predicated region
    $region10: #{tpu_custom_call.1} parent=1 // pred_check
      _
    $region11: #{tpu_custom_call.1} parent=1 // pred_check_branch
      %19 = sbr.rel (0) target = $region13
    $region12: #{tpu_custom_call.1} parent=1 // pred_region
      _
    $region13: #{tpu_custom_call.1} parent=1 // pred_fallthru
      _
    // Predicated region
    $region14: #{tpu_custom_call.1} parent=1 // pred_check
      _
    $region15: #{tpu_custom_call.1} parent=1 // pred_check_branch
      %21 = sbr.rel (0) target = $region17
    $region16: #{tpu_custom_call.1} parent=1 // pred_region
      _
    $region17: #{tpu_custom_call.1} parent=1 // pred_fallthru
      _
    // Predicated region
    $region18: #{tpu_custom_call.1} parent=1 // pred_check
      _
    $region19: #{tpu_custom_call.1} parent=1 // pred_check_branch
      %23 = sbr.rel (0) target = $region21
    $region20: #{tpu_custom_call.1} parent=1 // pred_region
      _
    $region21: #{tpu_custom_call.1} parent=1 // pred_fallthru
      _
    // Predicated region
    $region22: #{tpu_custom_call.1} parent=1 // pred_check
      _
    $region23: #{tpu_custom_call.1} parent=1 // pred_check_branch
      %25 = sbr.rel (0) target = $region25
    $region24: #{tpu_custom_call.1} parent=1 // pred_region
      _
    $region25: #{tpu_custom_call.1} parent=1 // pred_fallthru
      _
    // Predicated region
    $region26: #{tpu_custom_call.1} parent=1 // pred_check
      _
    $region27: #{tpu_custom_call.1} parent=1 // pred_check_branch
      %27 = sbr.rel (0) target = $region29
    $region28: #{tpu_custom_call.1} parent=1 // pred_region
      _
    $region29: #{tpu_custom_call.1} parent=1 // pred_fallthru
      _
    %v28 = vld [vmem:[%s0] sm:$0xff]
    %v29 = vld [vmem:[%s0 + $0x8] sm:$0xff]
    %v30 = vld [vmem:[%s0 + $0x10] sm:$0xff]
    %v31 = vld [vmem:[%s0 + $0x18] sm:$0xff]
    %v32 = vld [vmem:[%s0 + $0x20] sm:$0xff]
    %v33 = vld [vmem:[%s0 + $0x28] sm:$0xff]
    %v34 = vld [vmem:[%s0 + $0x30] sm:$0xff]
    %v35 = vld [vmem:[%s0 + $0x38] sm:$0xff]
    %v36 = vld [vmem:[%s0 + $0x40] sm:$0xff]
    %v37 = vld [vmem:[%s0 + $0x48] sm:$0xff]
    %v38 = vld [vmem:[%s0 + $0x50] sm:$0xff]
    %v39 = vld [vmem:[%s0 + $0x58] sm:$0xff]
    %v40 = vld [vmem:[%s0 + $0x60] sm:$0xff]
    %v41 = vld [vmem:[%s0 + $0x68] sm:$0xff]
    %v42 = vld [vmem:[%s0 + $0x70] sm:$0xff]
    %v43 = vld [vmem:[%s0 + $0x78] sm:$0xff]
    %v44 = vld [vmem:[%s1] sm:$0xff]
    %v45 = vld [vmem:[%s1 + $0x8] sm:$0xff]
    %v46 = vld [vmem:[%s1 + $0x10] sm:$0xff]
    %v47 = vld [vmem:[%s1 + $0x18] sm:$0xff]
    %v48 = vld [vmem:[%s2] sm:$0x1]
    %v50 = vperm.slane %v48, 0
    %vm52 = vcmask 261120
    %v54 = vsel %vm52, %v28, 0
    %v57 = vsel %vm52, %v29, 0
    %v60 = vsel %vm52, %v30, 0
    %v63 = vsel %vm52, %v31, 0
    %v66 = vsel %vm52, %v32, 0
    %v69 = vsel %vm52, %v33, 0
    %v72 = vsel %vm52, %v34, 0
    %v75 = vsel %vm52, %v35, 0
    %v78 = vsel %vm52, %v36, 0
    %v81 = vsel %vm52, %v37, 0
    %v84 = vsel %vm52, %v38, 0
    %v87 = vsel %vm52, %v39, 0
    %v90 = vsel %vm52, %v40, 0
    %v93 = vsel %vm52, %v41, 0
    %v96 = vsel %vm52, %v42, 0
    %v99 = vsel %vm52, %v43, 0
    %101 = vmatpush.msra.mxu0 0.0
    %102 = vmatpush.msra.mxu0 0.0
    %103 = vmatpush.msra.mxu0 0.0
    %104 = vmatpush.msra.mxu0 0.0
    %105 = vmatpush.msra.mxu0 0.0
    %106 = vmatpush.msra.mxu0 0.0
    %107 = vmatpush.msra.mxu0 0.0
    %108 = vmatpush.msra.mxu0 0.0
    %109 = vmatpush.msra.mxu0 0.0
    %110 = vmatpush.msra.mxu0 0.0
    %111 = vmatpush.msra.mxu0 0.0
    %112 = vmatpush.msra.mxu0 0.0
    %113 = vmatpush.msra.mxu0 %v47
    %114 = vmatpush.msra.mxu0 %v46
    %115 = vmatpush.msra.mxu0 %v45
    %116 = vmatpush.msra.mxu0 %v44
    %117 = vmatmul.f32.gmra.mxu0 %v54
    %v118 = vpop.f32.mrf.mxu0
    %v119 = vadd.f32 %v50, %v118
    %120 = vmatmul.f32.gmra.mxu0 %v57
    %v121 = vpop.f32.mrf.mxu0
    %v122 = vadd.f32 %v50, %v121
    %123 = vmatmul.f32.gmra.mxu0 %v60
    %v124 = vpop.f32.mrf.mxu0
    %v125 = vadd.f32 %v50, %v124
    %126 = vmatmul.f32.gmra.mxu0 %v63
    %v127 = vpop.f32.mrf.mxu0
    %v128 = vadd.f32 %v50, %v127
    %129 = vmatmul.f32.gmra.mxu0 %v66
    %v130 = vpop.f32.mrf.mxu0
    %v131 = vadd.f32 %v50, %v130
    %132 = vmatmul.f32.gmra.mxu0 %v69
    %v133 = vpop.f32.mrf.mxu0
    %v134 = vadd.f32 %v50, %v133
    %135 = vmatmul.f32.gmra.mxu0 %v72
    %v136 = vpop.f32.mrf.mxu0
    %v137 = vadd.f32 %v50, %v136
    %138 = vmatmul.f32.gmra.mxu0 %v75
    %v139 = vpop.f32.mrf.mxu0
    %v140 = vadd.f32 %v50, %v139
    %141 = vmatmul.f32.gmra.mxu0 %v78
    %v142 = vpop.f32.mrf.mxu0
    %v143 = vadd.f32 %v50, %v142
    %144 = vmatmul.f32.gmra.mxu0 %v81
    %v145 = vpop.f32.mrf.mxu0
    %v146 = vadd.f32 %v50, %v145
    %147 = vmatmul.f32.gmra.mxu0 %v84
    %v148 = vpop.f32.mrf.mxu0
    %v149 = vadd.f32 %v50, %v148
    %150 = vmatmul.f32.gmra.mxu0 %v87
    %v151 = vpop.f32.mrf.mxu0
    %v152 = vadd.f32 %v50, %v151
    %153 = vmatmul.f32.gmra.mxu0 %v90
    %v154 = vpop.f32.mrf.mxu0
    %v155 = vadd.f32 %v50, %v154
    %156 = vmatmul.f32.gmra.mxu0 %v93
    %v157 = vpop.f32.mrf.mxu0
    %v158 = vadd.f32 %v50, %v157
    %159 = vmatmul.f32.gmra.mxu0 %v96
    %v160 = vpop.f32.mrf.mxu0
    %v161 = vadd.f32 %v50, %v160
    %162 = vmatmul.f32.gmra.mxu0 %v99
    %v163 = vpop.f32.mrf.mxu0
    %v164 = vadd.f32 %v50, %v163
    %165 = vdwg.mxu0
    %v166 = vmax.f32 %v119, 0.0
    %v167 = vmax.f32 %v122, 0.0
    %v168 = vmax.f32 %v125, 0.0
    %v169 = vmax.f32 %v128, 0.0
    %v170 = vmax.f32 %v131, 0.0
    %v171 = vmax.f32 %v134, 0.0
    %v172 = vmax.f32 %v137, 0.0
    %v173 = vmax.f32 %v140, 0.0
    %v174 = vmax.f32 %v143, 0.0
    %v175 = vmax.f32 %v146, 0.0
    %v176 = vmax.f32 %v149, 0.0
    %v177 = vmax.f32 %v152, 0.0
    %v178 = vmax.f32 %v155, 0.0
    %v179 = vmax.f32 %v158, 0.0
    %v180 = vmax.f32 %v161, 0.0
    %v181 = vmax.f32 %v164, 0.0
    %v182 = vld [vmem:[%s3] sm:$0xff]
    %v183 = vld [vmem:[%s3 + $0x8] sm:$0xff]
    %v184 = vld [vmem:[%s3 + $0x10] sm:$0xff]
    %v185 = vld [vmem:[%s3 + $0x18] sm:$0xff]
    %v186 = vld [vmem:[%s4] sm:$0x1]
    %v188 = vperm.slane %v186, 0
    %v191 = vsel %vm52, %v166, 0
    %v194 = vsel %vm52, %v167, 0
    %v197 = vsel %vm52, %v168, 0
    %v200 = vsel %vm52, %v169, 0
    %v203 = vsel %vm52, %v170, 0
    %v206 = vsel %vm52, %v171, 0
    %v209 = vsel %vm52, %v172, 0
    %v212 = vsel %vm52, %v173, 0
    %v215 = vsel %vm52, %v174, 0
    %v218 = vsel %vm52, %v175, 0
    %v221 = vsel %vm52, %v176, 0
    %v224 = vsel %vm52, %v177, 0
    %v227 = vsel %vm52, %v178, 0
    %v230 = vsel %vm52, %v179, 0
    %v233 = vsel %vm52, %v180, 0
    %v236 = vsel %vm52, %v181, 0
    %238 = vmatpush.msra.mxu0 0.0
    %239 = vmatpush.msra.mxu0 0.0
    %240 = vmatpush.msra.mxu0 0.0
    %241 = vmatpush.msra.mxu0 0.0
    %242 = vmatpush.msra.mxu0 0.0
    %243 = vmatpush.msra.mxu0 0.0
    %244 = vmatpush.msra.mxu0 0.0
    %245 = vmatpush.msra.mxu0 0.0
    %246 = vmatpush.msra.mxu0 0.0
    %247 = vmatpush.msra.mxu0 0.0
    %248 = vmatpush.msra.mxu0 0.0
    %249 = vmatpush.msra.mxu0 0.0
    %250 = vmatpush.msra.mxu0 %v185
    %251 = vmatpush.msra.mxu0 %v184
    %252 = vmatpush.msra.mxu0 %v183
    %253 = vmatpush.msra.mxu0 %v182
    %254 = vmatmul.f32.gmra.mxu0 %v191
    %v255 = vpop.f32.mrf.mxu0
    %v256 = vadd.f32 %v188, %v255
    %257 = vmatmul.f32.gmra.mxu0 %v194
    %v258 = vpop.f32.mrf.mxu0
    %v259 = vadd.f32 %v188, %v258
    %260 = vmatmul.f32.gmra.mxu0 %v197
    %v261 = vpop.f32.mrf.mxu0
    %v262 = vadd.f32 %v188, %v261
    %263 = vmatmul.f32.gmra.mxu0 %v200
    %v264 = vpop.f32.mrf.mxu0
    %v265 = vadd.f32 %v188, %v264
    %266 = vmatmul.f32.gmra.mxu0 %v203
    %v267 = vpop.f32.mrf.mxu0
    %v268 = vadd.f32 %v188, %v267
    %269 = vmatmul.f32.gmra.mxu0 %v206
    %v270 = vpop.f32.mrf.mxu0
    %v271 = vadd.f32 %v188, %v270
    %272 = vmatmul.f32.gmra.mxu0 %v209
    %v273 = vpop.f32.mrf.mxu0
    %v274 = vadd.f32 %v188, %v273
    %275 = vmatmul.f32.gmra.mxu0 %v212
    %v276 = vpop.f32.mrf.mxu0
    %v277 = vadd.f32 %v188, %v276
    %278 = vmatmul.f32.gmra.mxu0 %v215
    %v279 = vpop.f32.mrf.mxu0
    %v280 = vadd.f32 %v188, %v279
    %281 = vmatmul.f32.gmra.mxu0 %v218
    %v282 = vpop.f32.mrf.mxu0
    %v283 = vadd.f32 %v188, %v282
    %284 = vmatmul.f32.gmra.mxu0 %v221
    %v285 = vpop.f32.mrf.mxu0
    %v286 = vadd.f32 %v188, %v285
    %287 = vmatmul.f32.gmra.mxu0 %v224
    %v288 = vpop.f32.mrf.mxu0
    %v289 = vadd.f32 %v188, %v288
    %290 = vmatmul.f32.gmra.mxu0 %v227
    %v291 = vpop.f32.mrf.mxu0
    %v292 = vadd.f32 %v188, %v291
    %293 = vmatmul.f32.gmra.mxu0 %v230
    %v294 = vpop.f32.mrf.mxu0
    %v295 = vadd.f32 %v188, %v294
    %296 = vmatmul.f32.gmra.mxu0 %v233
    %v297 = vpop.f32.mrf.mxu0
    %v298 = vadd.f32 %v188, %v297
    %299 = vmatmul.f32.gmra.mxu0 %v236
    %v300 = vpop.f32.mrf.mxu0
    %v301 = vadd.f32 %v188, %v300
    %302 = vdwg.mxu0
    %v303 = vmax.f32 %v256, 0.0
    %v304 = vmax.f32 %v259, 0.0
    %v305 = vmax.f32 %v262, 0.0
    %v306 = vmax.f32 %v265, 0.0
    %v307 = vmax.f32 %v268, 0.0
    %v308 = vmax.f32 %v271, 0.0
    %v309 = vmax.f32 %v274, 0.0
    %v310 = vmax.f32 %v277, 0.0
    %v311 = vmax.f32 %v280, 0.0
    %v312 = vmax.f32 %v283, 0.0
    %v313 = vmax.f32 %v286, 0.0
    %v314 = vmax.f32 %v289, 0.0
    %v315 = vmax.f32 %v292, 0.0
    %v316 = vmax.f32 %v295, 0.0
    %v317 = vmax.f32 %v298, 0.0
    %v318 = vmax.f32 %v301, 0.0
    %v319 = vld [vmem:[%s5] sm:$0x1]
    %v321 = vperm.slane %v319, 0
    %v323 = vmul.f32 %v303, %v321
    %v324 = vmul.f32 %v304, %v321
    %v325 = vmul.f32 %v305, %v321
    %v326 = vmul.f32 %v306, %v321
    %v327 = vmul.f32 %v307, %v321
    %v328 = vmul.f32 %v308, %v321
    %v329 = vmul.f32 %v309, %v321
    %v330 = vmul.f32 %v310, %v321
    %v331 = vmul.f32 %v311, %v321
    %v332 = vmul.f32 %v312, %v321
    %v333 = vmul.f32 %v313, %v321
    %v334 = vmul.f32 %v314, %v321
    %v335 = vmul.f32 %v315, %v321
    %v336 = vmul.f32 %v316, %v321
    %v337 = vmul.f32 %v317, %v321
    %v338 = vmul.f32 %v318, %v321
    %v339 = vsel %vm52, %v323, 0.0
    %340 = vadd.xlane.f32.xlu0 %v339
    %v341 = vpop.xlane.xlu0 %340
    %v342 = vsel %vm52, %v324, 0.0
    %343 = vadd.xlane.f32.xlu0 %v342
    %v344 = vpop.xlane.xlu0 %343
    %v345 = vsel %vm52, %v325, 0.0
    %346 = vadd.xlane.f32.xlu0 %v345
    %v347 = vpop.xlane.xlu0 %346
    %v348 = vsel %vm52, %v326, 0.0
    %349 = vadd.xlane.f32.xlu0 %v348
    %v350 = vpop.xlane.xlu0 %349
    %v351 = vsel %vm52, %v327, 0.0
    %352 = vadd.xlane.f32.xlu0 %v351
    %v353 = vpop.xlane.xlu0 %352
    %v354 = vsel %vm52, %v328, 0.0
    %355 = vadd.xlane.f32.xlu0 %v354
    %v356 = vpop.xlane.xlu0 %355
    %v357 = vsel %vm52, %v329, 0.0
    %358 = vadd.xlane.f32.xlu0 %v357
    %v359 = vpop.xlane.xlu0 %358
    %v360 = vsel %vm52, %v330, 0.0
    %361 = vadd.xlane.f32.xlu0 %v360
    %v362 = vpop.xlane.xlu0 %361
    %v363 = vsel %vm52, %v331, 0.0
    %364 = vadd.xlane.f32.xlu0 %v363
    %v365 = vpop.xlane.xlu0 %364
    %v366 = vsel %vm52, %v332, 0.0
    %367 = vadd.xlane.f32.xlu0 %v366
    %v368 = vpop.xlane.xlu0 %367
    %v369 = vsel %vm52, %v333, 0.0
    %370 = vadd.xlane.f32.xlu0 %v369
    %v371 = vpop.xlane.xlu0 %370
    %v372 = vsel %vm52, %v334, 0.0
    %373 = vadd.xlane.f32.xlu0 %v372
    %v374 = vpop.xlane.xlu0 %373
    %v375 = vsel %vm52, %v335, 0.0
    %376 = vadd.xlane.f32.xlu0 %v375
    %v377 = vpop.xlane.xlu0 %376
    %v378 = vsel %vm52, %v336, 0.0
    %379 = vadd.xlane.f32.xlu0 %v378
    %v380 = vpop.xlane.xlu0 %379
    %v381 = vsel %vm52, %v337, 0.0
    %382 = vadd.xlane.f32.xlu0 %v381
    %v383 = vpop.xlane.xlu0 %382
    %v384 = vsel %vm52, %v338, 0.0
    %385 = vadd.xlane.f32.xlu0 %v384
    %v386 = vpop.xlane.xlu0 %385
    %s387 = sld [smem:[#allocation2]]
    %v388 = vstv %s387
    %v389 = vadd.f32 %v341, %v388
    %v390 = vadd.f32 %v344, %v388
    %v391 = vadd.f32 %v347, %v388
    %v392 = vadd.f32 %v350, %v388
    %v393 = vadd.f32 %v353, %v388
    %v394 = vadd.f32 %v356, %v388
    %v395 = vadd.f32 %v359, %v388
    %v396 = vadd.f32 %v362, %v388
    %v397 = vadd.f32 %v365, %v388
    %v398 = vadd.f32 %v368, %v388
    %v399 = vadd.f32 %v371, %v388
    %v400 = vadd.f32 %v374, %v388
    %v401 = vadd.f32 %v377, %v388
    %v402 = vadd.f32 %v380, %v388
    %v403 = vadd.f32 %v383, %v388
    %v404 = vadd.f32 %v386, %v388
    %v421 = vlaneseq
    %v422 = vand.u32 %v421, 127
    %v423 = vperm.slane %v389, %v422
    %v424 = vadd.s32 %v422, 4294967288
    %v425 = vperm.slane %v390, %v424
    %vm426 = vcmask 130112
    %v427 = vsel %vm426, %v425, %v423
    %v428 = vadd.s32 %v422, 4294967280
    %v429 = vperm.slane %v391, %v428
    %vm430 = vcmask 195712
    %v431 = vsel %vm430, %v429, %v427
    %v432 = vadd.s32 %v422, 4294967272
    %v433 = vperm.slane %v392, %v432
    %vm434 = vcmask 261312
    %v435 = vsel %vm434, %v433, %v431
    %v436 = vadd.s32 %v422, 4294967264
    %v437 = vperm.slane %v393, %v436
    %vm438 = vcmask 326912
    %v439 = vsel %vm438, %v437, %v435
    %v440 = vadd.s32 %v422, 4294967256
    %v441 = vperm.slane %v394, %v440
    %vm442 = vcmask 392512
    %v443 = vsel %vm442, %v441, %v439
    %v444 = vadd.s32 %v422, 4294967248
    %v445 = vperm.slane %v395, %v444
    %vm446 = vcmask 458112
    %v447 = vsel %vm446, %v445, %v443
    %v448 = vadd.s32 %v422, 4294967240
    %v449 = vperm.slane %v396, %v448
    %vm450 = vcmask 523712
    %v451 = vsel %vm450, %v449, %v447
    %v452 = vadd.s32 %v422, 4294967232
    %v453 = vperm.slane %v397, %v452
    %vm454 = vcmask 589312
    %v455 = vsel %vm454, %v453, %v451
    %v456 = vadd.s32 %v422, 4294967224
    %v457 = vperm.slane %v398, %v456
    %vm458 = vcmask 654912
    %v459 = vsel %vm458, %v457, %v455
    %v460 = vadd.s32 %v422, 4294967216
    %v461 = vperm.slane %v399, %v460
    %vm462 = vcmask 720512
    %v463 = vsel %vm462, %v461, %v459
    %v464 = vadd.s32 %v422, 4294967208
    %v465 = vperm.slane %v400, %v464
    %vm466 = vcmask 786112
    %v467 = vsel %vm466, %v465, %v463
    %v468 = vadd.s32 %v422, 4294967200
    %v469 = vperm.slane %v401, %v468
    %vm470 = vcmask 851712
    %v471 = vsel %vm470, %v469, %v467
    %v472 = vadd.s32 %v422, 4294967192
    %v473 = vperm.slane %v402, %v472
    %vm474 = vcmask 917312
    %v475 = vsel %vm474, %v473, %v471
    %v476 = vadd.s32 %v422, 4294967184
    %v477 = vperm.slane %v403, %v476
    %vm478 = vcmask 982912
    %v479 = vsel %vm478, %v477, %v475
    %v480 = vadd.s32 %v422, 4294967176
    %v481 = vperm.slane %v404, %v480
    %vm482 = vcmask 1048512
    %v483 = vsel %vm482, %v481, %v479
    %485 = vst [vmem:[#allocation3] sm:$0x1] %v483
    // Predicated region
    $region30: #{tpu_custom_call.1} parent=1 // pred_check
      _
    $region31: #{tpu_custom_call.1} parent=1 // pred_check_branch
      %487 = sbr.rel (0) target = $region33
    $region32: #{tpu_custom_call.1} parent=1 // pred_region
      %489 = vsyncadd [#allocation4], 0
      %s491 = sshll.u32 [#allocation3], 4
      %s492 = int_to_ptr.vmem [resolvable:$true] %s491
      %s493 = sshll.u32 %s7, 4
      %s494 = int_to_ptr.hbm [resolvable:$true] %s493
      %496 = dma.vmem_to_hbm [thread:$0]  %s492, 16, %s494, [#allocation4]
    $region33: #{tpu_custom_call.1} parent=1 // pred_fallthru
      _
    // Predicated region
    $region34: #{tpu_custom_call.1} parent=1 // pred_check
      _
    $region35: #{tpu_custom_call.1} parent=1 // pred_check_branch
      %498 = sbr.rel (0) target = $region37
    $region36: #{tpu_custom_call.1} parent=1 // pred_region
      %500 = dma.done [#allocation4], 16
    $region37: #{tpu_custom_call.1} parent=1 // pred_fallthru
      _
    %501 = vsyncpa [#allocation4], 1

</llo_original>
